<compile_context>
chip_gen: v7x
topology: tpu7x:2x2x1
jax: 0.10.0
libtpu: 0.0.40
codegen_flags: <defaults>
</compile_context>

<pallas_src>
import functools
import math

import jax
import jax.numpy as jnp
from jax import lax
from jax.experimental import pallas as pl
from jax.experimental.pallas import tpu as pltpu


def _ls_kl_kernel(logp_ref, tgt_ref, part_ref, s_acc, t_acc, i_acc, *,
                  n_valid_rows, block_rows, block_v, n_v_tiles,
                  smoothing, confidence, base_const, sl_const,
                  ignore_val, ignore_col, ign_tile, ign_sub, ign_lane):
    """Grid step (i=row tile, j=vocab tile).

    Accumulates, per row, lane-dense partials of sum_v logp and logp[target]
    across the vocab axis; finalizes the closed-form row loss at the last vocab
    tile and emits a lane-dense (8, 128) partial for this row tile.
    """
    i = pl.program_id(0)
    j = pl.program_id(1)
    R = block_rows

    @pl.when(j == 0)
    def _init():
        s_acc[...] = jnp.zeros_like(s_acc)
        t_acc[...] = jnp.zeros_like(t_acc)
        i_acc[...] = jnp.zeros_like(i_acc)

    tgt = tgt_ref[...]                                        # (R, 1) int32
    lane = lax.broadcasted_iota(jnp.int32, (R, 128), 1)       # (R, 128)
    # d[r, l] == k*128  <=>  target of row r sits at lane l of sub-block k of this tile.
    d = (tgt - j * block_v) - lane                            # (R, 128) int32

    # Main loop: ~4 VPU ops / element (add; cmp + select + add).  128-lane static
    # slices of the VMEM block -> clean, aligned loads, no relayout.
    s_sum = s_acc[...]
    t_sum = t_acc[...]
    for k in range(block_v // 128):
        chunk = logp_ref[:, k * 128:(k + 1) * 128].astype(jnp.float32)
        s_sum = s_sum + chunk
        t_sum = t_sum + jnp.where(d == k * 128, chunk, 0.0)
    s_acc[...] = s_sum
    t_acc[...] = t_sum

    # logp at the ignore column (fixed sub-block / lane inside a fixed vocab tile).
    @pl.when(j == ign_tile)
    def _grab_ignore_col():
        blk = logp_ref[:, ign_sub * 128:(ign_sub + 1) * 128].astype(jnp.float32)
        i_acc[...] = jnp.sum(jnp.where(lane == ign_lane, blk, 0.0),
                             axis=1, keepdims=True)

    @pl.when(j == n_v_tiles - 1)
    def _finalize():
        # Closed-form per-row loss (constants folded at trace time).
        extra = jnp.where(tgt == ignore_col, sl_const,
                          smoothing * i_acc[...])                        # (R, 1)
        part = (smoothing - confidence) * t_acc[...] - smoothing * s_acc[...]  # (R,128)
        part = part + jnp.where(lane == 0, base_const + extra, 0.0)
        # Row validity: ignored rows and out-of-range rows of a partial block.
        row = lax.broadcasted_iota(jnp.int32, (R, 1), 0) + i * block_rows
        valid = jnp.logical_and(tgt != ignore_val, row < n_valid_rows)   # (R, 1)
        part = jnp.where(valid, part, 0.0)          # select -> garbage NaN/inf dropped
        # Layout-free row fold: (R,128) -> (R//8, 8, 128) -> sum -> (8, 128).
        part_ref[...] = jnp.sum(part.reshape(R // 8, 8, 128), axis=0)[None]


def label_smoothing_loss(output, target, *, label_smoothing, tgt_vocab_size,
                         ignore_index=-100, block_rows=None, block_v=None):
    """output: (B, V) float log-probs (f32 or bf16); target: (B,) int. Scalar f32 loss."""
    assert 0.0 < label_smoothing <= 1.0
    B, V = output.shape
    assert V == tgt_vocab_size
    assert V % 128 == 0, "vocab size must be a multiple of 128 (lane width)"

    itemsize = jnp.dtype(output.dtype).itemsize
    sub = {4: 8, 2: 16, 1: 32}.get(itemsize, 8)      # packed-sublane row granularity

    smoothing = float(label_smoothing) / (tgt_vocab_size - 2)
    confidence = 1.0 - float(label_smoothing)
    log_smoothing = math.log(smoothing) if smoothing > 0.0 else 0.0
    log_confidence = math.log(confidence) if confidence > 0.0 else 0.0
    ignore_val = int(ignore_index)                    # raw value compared to target
    ignore_col = ignore_val % V                       # PyTorch negative indexing
    base_const = confidence * log_confidence + (V - 2) * smoothing * log_smoothing
    sl_const = smoothing * log_smoothing

    target_i32 = target.astype(jnp.int32).reshape(B, 1)

    rows = B
    if B < 8:  # tiny batch: cheap pad so row blocks cover at least one sublane tile
        pad = 8 - B
        output = jnp.pad(output, ((0, pad), (0, 0)))
        target_i32 = jnp.pad(target_i32, ((0, pad), (0, 0)),
                             constant_values=ignore_val)
        rows = 8

    # ---- Vocab (lane) tiling: 128-multiple divisor of V, at most 2048 lanes ----
    if block_v is None:
        m = V // 128
        cap_sub = 16                                   # 2048 lanes
        pick = 1
        for s in range(min(m, cap_sub), 0, -1):
            if m % s == 0:
                pick = s
                break
        block_v = 128 * pick
    assert block_v % 128 == 0 and V % block_v == 0
    n_v = V // block_v

    # ---- Row tiling: target ~8 MiB input blocks, packed-sublane aligned ----
    if block_rows is None:
        target_bytes = 8 * 1024 * 1024
        br = max(sub, target_bytes // (block_v * itemsize))
        br = min(br, 4096)                             # bounds VMEM scratch size
        br = max((br // sub) * sub, sub)
        avail = (rows // sub) * sub
        if avail == 0:
            avail = (rows // 8) * 8
        br = max(min(br, avail), 8)
        n_r = -(-rows // br)
        # Megacore balance (v7x: 2 TCs): prefer >=2 row tiles if blocks stay >=2 MiB.
        if n_r == 1 and rows > sub:
            half = (((rows + 1) // 2) + sub - 1) // sub * sub
            if sub <= half < br and half * block_v * itemsize >= 2 * 1024 * 1024:
                br = half
        block_rows = br
    assert block_rows % 8 == 0
    n_r = -(-rows // block_rows)

    ign_tile = ignore_col // block_v
    ign_sub = (ignore_col % block_v) // 128
    ign_lane = ignore_col % 128

    kernel = functools.partial(
        _ls_kl_kernel,
        n_valid_rows=B, block_rows=block_rows, block_v=block_v, n_v_tiles=n_v,
        smoothing=smoothing, confidence=confidence,
        base_const=base_const, sl_const=sl_const,
        ignore_val=ignore_val, ignore_col=ignore_col,
        ign_tile=ign_tile, ign_sub=ign_sub, ign_lane=ign_lane)

    block_bytes = block_rows * block_v * itemsize
    # 2x double-buffered input + target block + 3 scratch accumulators + margin.
    vmem_limit = int(max(32 * 1024 * 1024,
                         2 * block_bytes + 6 * block_rows * 128 * 4
                         + 8 * 1024 * 1024))

    partials = pl.pallas_call(
        kernel,
        out_shape=jax.ShapeDtypeStruct((n_r, 8, 128), jnp.float32),
        grid_spec=pltpu.PrefetchScalarGridSpec(
            num_scalar_prefetch=0,
            grid=(n_r, n_v),
            in_specs=[
                pl.BlockSpec((block_rows, block_v), lambda i, j: (i, j)),
                pl.BlockSpec((block_rows, 1), lambda i, j: (i, 0)),
            ],
            out_specs=pl.BlockSpec((1, 8, 128), lambda i, j: (i, 0, 0)),
            scratch_shapes=[
                pltpu.VMEM((block_rows, 128), jnp.float32),   # sum_v logp
                pltpu.VMEM((block_rows, 128), jnp.float32),   # logp[target]
                pltpu.VMEM((block_rows, 1), jnp.float32),     # logp[ignore_col]
            ]),
        compiler_params=pltpu.CompilerParams(
            dimension_semantics=("parallel", "arbitrary"),
            vmem_limit_bytes=vmem_limit),
    )(output, target_i32)

    return jnp.sum(partials)


def _reference_loss(output, target, label_smoothing, V, ignore_index):
    smoothing = label_smoothing / (V - 2)
    confidence = 1.0 - label_smoothing
    one_hot = jnp.full((V,), smoothing, dtype=jnp.float32).at[ignore_index].set(0.0)
    B = target.shape[0]
    model_prob = jnp.tile(one_hot[None, :], (B, 1))
    model_prob = model_prob.at[jnp.arange(B), target].set(confidence)
    model_prob = jnp.where((target == ignore_index)[:, None], 0.0, model_prob)
    safe = jnp.where(model_prob > 0, model_prob, 1.0)
    return jnp.sum(jnp.where(model_prob > 0,
                             model_prob * (jnp.log(safe) - output.astype(jnp.float32)),
                             0.0))


if __name__ == "__main__":
    key = jax.random.PRNGKey(0)

    # ---- Test 1: small V, padding index 0 as ignore, some ignored rows ----
    B, V = 16, 256
    label_smoothing = 0.1
    ignore_index = 0
    k_logits, k_tgt, key = jax.random.split(key, 3)
    logits = jax.random.normal(k_logits, (B, V), dtype=jnp.float32)
    output = jax.nn.log_softmax(logits, axis=-1)
    target = jax.random.randint(k_tgt, (B,), 1, V, dtype=jnp.int32)
    target = target.at[3].set(ignore_index).at[9].set(ignore_index)

    loss = label_smoothing_loss(output, target,
                                label_smoothing=label_smoothing,
                                tgt_vocab_size=V,
                                ignore_index=ignore_index)
    loss = jax.block_until_ready(loss)
    ref = _reference_loss(output, target, label_smoothing, V, ignore_index)
    assert jnp.allclose(loss, ref, rtol=1e-5, atol=1e-4), (loss, ref)

    # ---- Test 2: ragged batch (no full-tensor pad), multi-tile vocab axis,
    #      default ignore_index=-100 ----
    B2, V2 = 13, 4096
    k_logits2, k_tgt2, key = jax.random.split(key, 3)
    logits2 = jax.random.normal(k_logits2, (B2, V2), dtype=jnp.float32)
    output2 = jax.nn.log_softmax(logits2, axis=-1)
    target2 = jax.random.randint(k_tgt2, (B2,), 0, V2, dtype=jnp.int32)

    loss2 = label_smoothing_loss(output2, target2,
                                 label_smoothing=0.2,
                                 tgt_vocab_size=V2,
                                 ignore_index=-100)
    loss2 = jax.block_until_ready(loss2)
    ref2 = _reference_loss(output2, target2, 0.2, V2, -100)
    assert jnp.allclose(loss2, ref2, rtol=1e-4, atol=1e-2), (loss2, ref2)

    print("KERNEL_OK")
</pallas_src>

<mosaic_0001>
module attributes {stable_mosaic.version = 11 : i64} {
  func.func @_ls_kl_kernel(%arg0: i32, %arg1: i32, %arg2: memref<16x256xf32, #tpu.memory_space<vmem>>, %arg3: memref<16x1xi32, #tpu.memory_space<vmem>>, %arg4: memref<1x8x128xf32, #tpu.memory_space<vmem>>, %arg5: memref<16x128xf32, #tpu.memory_space<vmem>>, %arg6: memref<16x128xf32, #tpu.memory_space<vmem>>, %arg7: memref<16x1xf32, #tpu.memory_space<vmem>>) attributes {dimension_semantics = [#tpu.dimension_semantics<parallel>, #tpu.dimension_semantics<arbitrary>], iteration_bounds = array<i64: 1, 1>, scalar_prefetch = 0 : i64, scratch_operands = 3 : i64, tpu.core_type = #tpu.core_type<tc>, window_params = [{transform_indices = @transform_0, window_bounds = array<i64: 16, 256>}, {transform_indices = @transform_1, window_bounds = array<i64: 16, 1>}, {transform_indices = @transform_2, window_bounds = array<i64: 1, 8, 128>}]} {
    %c0_i32 = arith.constant 0 : i32
    %0 = arith.cmpi eq, %arg1, %c0_i32 : i32
    %1 = arith.extui %0 : i1 to i32
    %c0_i32_0 = arith.constant 0 : i32
    %2 = arith.cmpi ne, %1, %c0_i32_0 : i32
    scf.if %2 {
      %cst_19 = arith.constant 0.000000e+00 : f32
      %34 = vector.broadcast %cst_19 : f32 to vector<16x128xf32>
      %c0_20 = arith.constant 0 : index
      %c0_21 = arith.constant 0 : index
      %35 = vector.load %arg5[%c0_20, %c0_21] : memref<16x128xf32, #tpu.memory_space<vmem>>, vector<16x128xf32>
      tpu.vector_store %arg5[%c0_20, %c0_21], %34 {strides = array<i32>} : memref<16x128xf32, #tpu.memory_space<vmem>>, vector<16x128xf32>,
      %cst_22 = arith.constant 0.000000e+00 : f32
      %36 = vector.broadcast %cst_22 : f32 to vector<16x128xf32>
      %c0_23 = arith.constant 0 : index
      %c0_24 = arith.constant 0 : index
      %37 = vector.load %arg6[%c0_23, %c0_24] : memref<16x128xf32, #tpu.memory_space<vmem>>, vector<16x128xf32>
      tpu.vector_store %arg6[%c0_23, %c0_24], %36 {strides = array<i32>} : memref<16x128xf32, #tpu.memory_space<vmem>>, vector<16x128xf32>,
      %cst_25 = arith.constant 0.000000e+00 : f32
      %38 = vector.broadcast %cst_25 : f32 to vector<16x1xf32>
      %c0_26 = arith.constant 0 : index
      %c0_27 = arith.constant 0 : index
      %39 = vector.load %arg7[%c0_26, %c0_27] : memref<16x1xf32, #tpu.memory_space<vmem>>, vector<16x1xf32>
      tpu.vector_store %arg7[%c0_26, %c0_27], %38 {strides = array<i32>} : memref<16x1xf32, #tpu.memory_space<vmem>>, vector<16x1xf32>,
    } else {
    }
    %c0 = arith.constant 0 : index
    %c0_1 = arith.constant 0 : index
    %3 = vector.load %arg3[%c0, %c0_1] : memref<16x1xi32, #tpu.memory_space<vmem>>, vector<16x1xi32>
    %4 = tpu.iota {dimensions = array<i32: 1>} : vector<16x128xi32>
    %c256_i32 = arith.constant 256 : i32
    %5 = arith.muli %arg1, %c256_i32 : i32
    %6 = vector.broadcast %5 : i32 to vector<16x1xi32>
    %7 = arith.subi %3, %6 : vector<16x1xi32>
    %8 = vector.broadcast %7 : vector<16x1xi32> to vector<16x128xi32>
    %9 = arith.subi %8, %4 : vector<16x128xi32>
    %c0_2 = arith.constant 0 : index
    %c0_3 = arith.constant 0 : index
    %10 = vector.load %arg5[%c0_2, %c0_3] : memref<16x128xf32, #tpu.memory_space<vmem>>, vector<16x128xf32>
    %c0_4 = arith.constant 0 : index
    %c0_5 = arith.constant 0 : index
    %11 = vector.load %arg6[%c0_4, %c0_5] : memref<16x128xf32, #tpu.memory_space<vmem>>, vector<16x128xf32>
    %c0_6 = arith.constant 0 : index
    %c0_7 = arith.constant 0 : index
    %12 = vector.load %arg2[%c0_6, %c0_7] : memref<16x256xf32, #tpu.memory_space<vmem>>, vector<16x128xf32>
    %13 = arith.addf %10, %12 : vector<16x128xf32>
    %c0_i32_8 = arith.constant 0 : i32
    %14 = vector.broadcast %c0_i32_8 : i32 to vector<16x128xi32>
    %15 = arith.cmpi eq, %9, %14 : vector<16x128xi32>
    %cst = arith.constant 0.000000e+00 : f32
    %16 = vector.broadcast %cst : f32 to vector<16x128xf32>
    %17 = arith.select %15, %12, %16 : vector<16x128xi1>, vector<16x128xf32>
    %18 = arith.addf %11, %17 : vector<16x128xf32>
    %c0_9 = arith.constant 0 : index
    %c128 = arith.constant 128 : index
    %19 = vector.load %arg2[%c0_9, %c128] : memref<16x256xf32, #tpu.memory_space<vmem>>, vector<16x128xf32>
    %20 = arith.addf %13, %19 : vector<16x128xf32>
    %c128_i32 = arith.constant 128 : i32
    %21 = vector.broadcast %c128_i32 : i32 to vector<16x128xi32>
    %22 = arith.cmpi eq, %9, %21 : vector<16x128xi32>
    %cst_10 = arith.constant 0.000000e+00 : f32
    %23 = vector.broadcast %cst_10 : f32 to vector<16x128xf32>
    %24 = arith.select %22, %19, %23 : vector<16x128xi1>, vector<16x128xf32>
    %25 = arith.addf %18, %24 : vector<16x128xf32>
    %c0_11 = arith.constant 0 : index
    %c0_12 = arith.constant 0 : index
    %26 = vector.load %arg5[%c0_11, %c0_12] : memref<16x128xf32, #tpu.memory_space<vmem>>, vector<16x128xf32>
    tpu.vector_store %arg5[%c0_11, %c0_12], %20 {strides = array<i32>} : memref<16x128xf32, #tpu.memory_space<vmem>>, vector<16x128xf32>,
    %c0_13 = arith.constant 0 : index
    %c0_14 = arith.constant 0 : index
    %27 = vector.load %arg6[%c0_13, %c0_14] : memref<16x128xf32, #tpu.memory_space<vmem>>, vector<16x128xf32>
    tpu.vector_store %arg6[%c0_13, %c0_14], %25 {strides = array<i32>} : memref<16x128xf32, #tpu.memory_space<vmem>>, vector<16x128xf32>,
    %c0_i32_15 = arith.constant 0 : i32
    %28 = arith.cmpi eq, %arg1, %c0_i32_15 : i32
    %29 = arith.extui %28 : i1 to i32
    %c0_i32_16 = arith.constant 0 : i32
    %30 = arith.cmpi ne, %29, %c0_i32_16 : i32
    scf.if %30 {
      %c0_19 = arith.constant 0 : index
      %c0_20 = arith.constant 0 : index
      %34 = vector.load %arg2[%c0_19, %c0_20] : memref<16x256xf32, #tpu.memory_space<vmem>>, vector<16x128xf32>
      %c0_i32_21 = arith.constant 0 : i32
      %35 = vector.broadcast %c0_i32_21 : i32 to vector<16x128xi32>
      %36 = arith.cmpi eq, %4, %35 : vector<16x128xi32>
      %cst_22 = arith.constant 0.000000e+00 : f32
      %37 = vector.broadcast %cst_22 : f32 to vector<16x128xf32>
      %38 = arith.select %36, %34, %37 : vector<16x128xi1>, vector<16x128xf32>
      %cst_23 = arith.constant dense<0.000000e+00> : vector<16xf32>
      %39 = vector.multi_reduction <add>, %38, %cst_23 [1] : vector<16x128xf32> to vector<16xf32>
      %40 = vector.shape_cast %39 : vector<16xf32> to vector<16x1xf32>
      %c0_24 = arith.constant 0 : index
      %c0_25 = arith.constant 0 : index
      %41 = vector.load %arg7[%c0_24, %c0_25] : memref<16x1xf32, #tpu.memory_space<vmem>>, vector<16x1xf32>
      tpu.vector_store %arg7[%c0_24, %c0_25], %40 {strides = array<i32>} : memref<16x1xf32, #tpu.memory_space<vmem>>, vector<16x1xf32>,
    } else {
    }
    %c0_i32_17 = arith.constant 0 : i32
    %31 = arith.cmpi eq, %arg1, %c0_i32_17 : i32
    %32 = arith.extui %31 : i1 to i32
    %c0_i32_18 = arith.constant 0 : i32
    %33 = arith.cmpi ne, %32, %c0_i32_18 : i32
    scf.if %33 {
      %c0_i32_19 = arith.constant 0 : i32
      %34 = vector.broadcast %c0_i32_19 : i32 to vector<16x1xi32>
      %35 = arith.cmpi eq, %3, %34 : vector<16x1xi32>
      %c0_20 = arith.constant 0 : index
      %c0_21 = arith.constant 0 : index
      %36 = vector.load %arg7[%c0_20, %c0_21] : memref<16x1xf32, #tpu.memory_space<vmem>>, vector<16x1xf32>
      %cst_22 = arith.constant 3.93700786E-4 : f32
      %37 = vector.broadcast %cst_22 : f32 to vector<16x1xf32>
      %38 = arith.mulf %37, %36 : vector<16x1xf32>
      %cst_23 = arith.constant -0.00308658252 : f32
      %39 = vector.broadcast %cst_23 : f32 to vector<16x1xf32>
      %40 = arith.select %35, %39, %38 : vector<16x1xi1>, vector<16x1xf32>
      %c0_24 = arith.constant 0 : index
      %c0_25 = arith.constant 0 : index
      %41 = vector.load %arg6[%c0_24, %c0_25] : memref<16x128xf32, #tpu.memory_space<vmem>>, vector<16x128xf32>
      %cst_26 = arith.constant -0.899606287 : f32
      %42 = vector.broadcast %cst_26 : f32 to vector<16x128xf32>
      %43 = arith.mulf %42, %41 : vector<16x128xf32>
      %c0_27 = arith.constant 0 : index
      %c0_28 = arith.constant 0 : index
      %44 = vector.load %arg5[%c0_27, %c0_28] : memref<16x128xf32, #tpu.memory_space<vmem>>, vector<16x128xf32>
      %cst_29 = arith.constant 3.93700786E-4 : f32
      %45 = vector.broadcast %cst_29 : f32 to vector<16x128xf32>
      %46 = arith.mulf %45, %44 : vector<16x128xf32>
      %47 = arith.subf %43, %46 : vector<16x128xf32>
      %c0_i32_30 = arith.constant 0 : i32
      %48 = vector.broadcast %c0_i32_30 : i32 to vector<16x128xi32>
      %49 = arith.cmpi eq, %4, %48 : vector<16x128xi32>
      %cst_31 = arith.constant -0.878816425 : f32
      %50 = vector.broadcast %cst_31 : f32 to vector<16x1xf32>
      %51 = arith.addf %50, %40 : vector<16x1xf32>
      %cst_32 = arith.constant 0.000000e+00 : f32
      %52 = vector.shape_cast %51 : vector<16x1xf32> to vector<16x1xf32>
      %53 = vector.broadcast %52 : vector<16x1xf32> to vector<16x128xf32>
      %54 = vector.broadcast %cst_32 : f32 to vector<16x128xf32>
      %55 = arith.select %49, %53, %54 : vector<16x128xi1>, vector<16x128xf32>
      %56 = arith.addf %47, %55 : vector<16x128xf32>
      %57 = tpu.iota {dimensions = array<i32: 0>} : vector<16x1xi32>
      %c16_i32 = arith.constant 16 : i32
      %58 = arith.muli %arg0, %c16_i32 : i32
      %59 = vector.broadcast %58 : i32 to vector<16x1xi32>
      %60 = arith.addi %57, %59 : vector<16x1xi32>
      %c0_i32_33 = arith.constant 0 : i32
      %61 = vector.broadcast %c0_i32_33 : i32 to vector<16x1xi32>
      %62 = arith.cmpi ne, %3, %61 : vector<16x1xi32>
      %c16_i32_34 = arith.constant 16 : i32
      %63 = vector.broadcast %c16_i32_34 : i32 to vector<16x1xi32>
      %64 = arith.cmpi slt, %60, %63 : vector<16x1xi32>
      %65 = arith.andi %62, %64 : vector<16x1xi1>
      %cst_35 = arith.constant 0.000000e+00 : f32
      %66 = vector.shape_cast %65 : vector<16x1xi1> to vector<16x1xi1>
      %67 = vector.broadcast %66 : vector<16x1xi1> to vector<16x128xi1>
      %68 = vector.broadcast %cst_35 : f32 to vector<16x128xf32>
      %69 = arith.select %67, %56, %68 : vector<16x128xi1>, vector<16x128xf32>
      %70 = vector.shape_cast %69 : vector<16x128xf32> to vector<2x8x128xf32>
      %cst_36 = arith.constant dense<0.000000e+00> : vector<8x128xf32>
      %71 = vector.multi_reduction <add>, %70, %cst_36 [0] : vector<2x8x128xf32> to vector<8x128xf32>
      %72 = vector.shape_cast %71 : vector<8x128xf32> to vector<1x8x128xf32>
      %c0_37 = arith.constant 0 : index
      %c0_38 = arith.constant 0 : index
      %c0_39 = arith.constant 0 : index
      %73 = vector.load %arg4[%c0_37, %c0_38, %c0_39] : memref<1x8x128xf32, #tpu.memory_space<vmem>>, vector<1x8x128xf32>
      tpu.vector_store %arg4[%c0_37, %c0_38, %c0_39], %72 {strides = array<i32>} : memref<1x8x128xf32, #tpu.memory_space<vmem>>, vector<1x8x128xf32>,
    } else {
    }
    return
  }
  func.func @transform_0(%arg0: i32, %arg1: i32) -> (i32, i32) {
    %c0_i32 = arith.constant 0 : i32
    return %arg0, %arg1 : i32, i32
  }
  func.func @transform_1(%arg0: i32, %arg1: i32) -> (i32, i32) {
    %c0_i32 = arith.constant 0 : i32
    %c0_i32_0 = arith.constant 0 : i32
    return %arg0, %c0_i32 : i32, i32
  }
  func.func @transform_2(%arg0: i32, %arg1: i32) -> (i32, i32, i32) {
    %c0_i32 = arith.constant 0 : i32
    %c0_i32_0 = arith.constant 0 : i32
    %c0_i32_1 = arith.constant 0 : i32
    return %arg0, %c0_i32, %c0_i32_0 : i32, i32, i32
  }
}

</mosaic_0001>

<llo_original>
// kernel: tpu_custom_call.1
$region0: #{tpu_custom_call.1}
  #allocation0 [shape = 'u32[]', space=smem, size = 0x4, offset = 0x4, fixed_abs, tag = 'smem constant byte address 0x4 - core index']
  #allocation1 [shape = 'u32[144,128]{1,0:T(1,128)}', space=vmem, size = 0x12000, scoped, tag = 'internal scratch']
  #allocation2 [shape = 'f32[16,128]{1,0:T(8,128)}', space=vmem, size = 0x2000, scoped, tag = 'scratch operand']
  #allocation3 [shape = 'f32[16,128]{1,0:T(8,128)}', space=vmem, size = 0x2000, scoped, tag = 'scratch operand']
  #allocation4 [shape = 'f32[16,1]{1,0:T(8,128)}', space=vmem, size = 0x2000, scoped, tag = 'scratch operand']
  %s0 = inlined_call_operand.hbm [shape: f32[16,256], index: 0, kind: input, shape index: {}]
  %s1 = inlined_call_operand.vmem [shape: s32[16,1], index: 1, kind: input, shape index: {}]
  %s2 = inlined_call_operand.hbm [shape: f32[1,8,128], index: 2, kind: output, shape index: {}]
  %s3 = sld [smem:[#allocation0]]
  $region30: #{tpu_custom_call.1} parent=0
    _
  %s5 = ssub.s32 1, %s3
  %s6 = scalar_select 0, %s5, %s3
  $region1: #{tpu_custom_call.1} parent=0
    #allocation5 [shape = 'u8[16384]{0}', space=vmem, size = 0x4000, scoped, tag = 'input window, operand 0, single buffered']
    #allocation6 [shape = 's32[1]{0}', space=sflag, size = 0x4, scoped, tag = 'scoped memory for tpu_custom_call.1']
    #allocation7 [shape = 's32[1]{0}', space=sflag, size = 0x4, scoped, tag = 'scoped memory for tpu_custom_call.1']
    #allocation8 [shape = 'u8[4096]{0}', space=vmem, size = 0x1000, scoped, tag = 'output window, operand 0, single buffered']
    %7 = vsyncpa [#allocation6], 0
    %8 = vsyncpa [#allocation7], 0
    // Predicated region
    $region2: #{tpu_custom_call.1} parent=1 // pred_check
      _
    $region3: #{tpu_custom_call.1} parent=1 // pred_check_branch
      %10 = sbr.rel (0) target = $region5
    $region4: #{tpu_custom_call.1} parent=1 // pred_region
      %s12 = ssub.s32 512, 512
      %13 = vsyncadd [#allocation6], %s12
      %s14 = sshll.u32 [#allocation5], 4
      %s15 = int_to_ptr.vmem [resolvable:$true] %s14
      %20 = dma.hbm_to_vmem [thread:$0]  %s0, 512, %s15, [#allocation6], 256, 256, 16
    $region5: #{tpu_custom_call.1} parent=1 // pred_fallthru
      _
    // Predicated region
    $region6: #{tpu_custom_call.1} parent=1 // pred_check
      _
    $region7: #{tpu_custom_call.1} parent=1 // pred_check_branch
      %22 = sbr.rel (0) target = $region9
    $region8: #{tpu_custom_call.1} parent=1 // pred_region
      _
    $region9: #{tpu_custom_call.1} parent=1 // pred_fallthru
      _
    // Predicated region
    $region10: #{tpu_custom_call.1} parent=1 // pred_check
      _
    $region11: #{tpu_custom_call.1} parent=1 // pred_check_branch
      %24 = sbr.rel (0) target = $region13
    $region12: #{tpu_custom_call.1} parent=1 // pred_region
      %25 = dma.done [#allocation6], 512
    $region13: #{tpu_custom_call.1} parent=1 // pred_fallthru
      _
    %p26 = scmp.eq.s32.totalorder 0, 0
    // Predicated region
    $region14: #{tpu_custom_call.1} parent=1 // pred_check
      %p27 = pneg %p26
    $region15: #{tpu_custom_call.1} parent=1 // pred_check_branch
      %29 = sbr.rel (%p27) target = $region17
    $region16: #{tpu_custom_call.1} parent=1 // pred_region
      %30 = vst [vmem:[#allocation2] sm:$0xff] 0.0
      %31 = vst [vmem:[#allocation2 + $0x8] sm:$0xff] 0.0
      %32 = vst [vmem:[#allocation3] sm:$0xff] 0.0
      %33 = vst [vmem:[#allocation3 + $0x8] sm:$0xff] 0.0
      %vm34 = vcmask 7168
      %35 = vst.msk [vmem:[#allocation4] sm:$0xff] %vm34, 0.0
      %36 = vst.msk [vmem:[#allocation4 + $0x8] sm:$0xff] %vm34, 0.0
    $region17: #{tpu_custom_call.1} parent=1 // pred_fallthru
      _
    %v37 = vld [vmem:[%s1] sm:$0xff]
    %v38 = vld [vmem:[%s1 + $0x8] sm:$0xff]
    %v39 = vlaneseq
    %v40 = vand.u32 %v39, 127
    %s41 = smul.u32 0, 256
    %v42 = vstv %s41
    %v43 = vsub.s32 %v37, %v42
    %v44 = vsub.s32 %v38, %v42
    %45 = vset.pattern.permute.xlu0 0
    %46 = vperm.xlu0 %45, %v43
    %v47 = vpop.permute.xlu0 %46
    %48 = vset.pattern.permute.xlu0 0
    %49 = vperm.xlu0 %48, %v44
    %v50 = vpop.permute.xlu0 %49
    %v51 = vsub.s32 %v47, %v40
    %v52 = vsub.s32 %v50, %v40
    %v53 = vld [vmem:[#allocation2] sm:$0xff]
    %v54 = vld [vmem:[#allocation2 + $0x8] sm:$0xff]
    %v55 = vld [vmem:[#allocation3] sm:$0xff]
    %v56 = vld [vmem:[#allocation3 + $0x8] sm:$0xff]
    %v57 = vld [vmem:[#allocation5] sm:$0xff]
    %v58 = vld [vmem:[#allocation5 + $0x10] sm:$0xff]
    %v59 = vadd.f32 %v53, %v57
    %v60 = vadd.f32 %v54, %v58
    %vm61 = vcmp.eq.s32.totalorder %v51, 0
    %vm62 = vcmp.eq.s32.totalorder %v52, 0
    %v63 = vsel %vm61, %v57, 0.0
    %v64 = vsel %vm62, %v58, 0.0
    %v65 = vadd.f32 %v55, %v63
    %v66 = vadd.f32 %v56, %v64
    %v67 = vld [vmem:[#allocation5 + $0x8] sm:$0xff]
    %v68 = vld [vmem:[#allocation5 + $0x18] sm:$0xff]
    %v69 = vadd.f32 %v59, %v67
    %v70 = vadd.f32 %v60, %v68
    %vm71 = vcmp.eq.s32.totalorder %v51, 128
    %vm72 = vcmp.eq.s32.totalorder %v52, 128
    %v73 = vsel %vm71, %v67, 0.0
    %v74 = vsel %vm72, %v68, 0.0
    %v75 = vadd.f32 %v65, %v73
    %v76 = vadd.f32 %v66, %v74
    %77 = vst [vmem:[#allocation2] sm:$0xff] %v69
    %78 = vst [vmem:[#allocation2 + $0x8] sm:$0xff] %v70
    %79 = vst [vmem:[#allocation3] sm:$0xff] %v75
    %80 = vst [vmem:[#allocation3 + $0x8] sm:$0xff] %v76
    // Predicated region
    $region18: #{tpu_custom_call.1} parent=1 // pred_check
      %p81 = pneg %p26
    $region19: #{tpu_custom_call.1} parent=1 // pred_check_branch
      %83 = sbr.rel (%p81) target = $region21
    $region20: #{tpu_custom_call.1} parent=1 // pred_region
      %v84 = vld [vmem:[#allocation5] sm:$0xff]
      %v85 = vld [vmem:[#allocation5 + $0x10] sm:$0xff]
      %vm86 = vcmp.eq.s32.totalorder %v40, 0
      %v87 = vsel %vm86, %v84, 0.0
      %v88 = vsel %vm86, %v85, 0.0
      %89 = vadd.xlane.f32.xlu0 %v87
      %v90 = vpop.xlane.xlu0 %89
      %91 = vadd.xlane.f32.xlu0 %v88
      %v92 = vpop.xlane.xlu0 %91
      %vm93 = vcmask 7168
      %94 = vst.msk [vmem:[#allocation4] sm:$0xff] %vm93, %v90
      %95 = vst.msk [vmem:[#allocation4 + $0x8] sm:$0xff] %vm93, %v92
      %vm96 = vcmp.eq.s32.totalorder %v37, 0
      %vm97 = vcmp.eq.s32.totalorder %v38, 0
      %v98 = vld [vmem:[#allocation4] sm:$0xff]
      %v99 = vld [vmem:[#allocation4 + $0x8] sm:$0xff]
      %v100 = vmul.f32 %v98, 0.0003937008
      %v101 = vmul.f32 %v99, 0.0003937008
      %v102 = vsel %vm96, -0.0030865825, %v100
      %v103 = vsel %vm97, -0.0030865825, %v101
      %v104 = vld [vmem:[#allocation3] sm:$0xff]
      %v105 = vld [vmem:[#allocation3 + $0x8] sm:$0xff]
      %v106 = vmul.f32 %v104, -0.8996063
      %v107 = vmul.f32 %v105, -0.8996063
      %v108 = vld [vmem:[#allocation2] sm:$0xff]
      %v109 = vld [vmem:[#allocation2 + $0x8] sm:$0xff]
      %v110 = vmul.f32 %v108, 0.0003937008
      %v111 = vmul.f32 %v109, 0.0003937008
      %v112 = vsub.f32 %v106, %v110
      %v113 = vsub.f32 %v107, %v111
      %v114 = vadd.f32 %v102, -0.8788164
      %v115 = vadd.f32 %v103, -0.8788164
      %117 = vset.pattern.permute.xlu0 0
      %118 = vperm.xlu0 %117, %v114
      %v119 = vpop.permute.xlu0 %118
      %122 = vset.pattern.permute.xlu0 0
      %123 = vperm.xlu0 %122, %v115
      %v124 = vpop.permute.xlu0 %123
      %v126 = vsel %vm86, %v119, 0.0
      %v127 = vsel %vm86, %v124, 0.0
      %v128 = vadd.f32 %v112, %v126
      %v129 = vadd.f32 %v113, %v127
      %v130 = vlaneseq
      %v131 = vshrl.u32 %v130, 7
      %v132 = vadd.s32 %v131, 8
      %s133 = smul.u32 0, 16
      %v134 = vstv %s133
      %v135 = vadd.s32 %v131, %v134
      %v136 = vadd.s32 %v132, %v134
      %vm137 = vcmp.ne.s32.totalorder %v37, 0
      %vm138 = vcmp.ne.s32.totalorder %v38, 0
      %vm139 = vcmp.lt.s32.totalorder %v135, 16
      %vm140 = vcmp.lt.s32.totalorder %v136, 16
      %vm141 = vmand %vm137, %vm139
      %vm142 = vmand %vm138, %vm140
      %v143 = vsel %vm141, 1, 0
      %v144 = vsel %vm142, 1, 0
      %145 = vset.pattern.permute.xlu0 0
      %146 = vperm.xlu0 %145, %v143
      %v147 = vpop.permute.xlu0 %146
      %148 = vset.pattern.permute.xlu0 0
      %149 = vperm.xlu0 %148, %v144
      %v150 = vpop.permute.xlu0 %149
      %vm151 = vcmp.eq.s32.totalorder %v147, 1
      %vm152 = vcmp.eq.s32.totalorder %v150, 1
      %v153 = vsel %vm151, %v128, 0.0
      %v154 = vsel %vm152, %v129, 0.0
      %v155 = vadd.f32 %v153, %v154
      %156 = vst [vmem:[#allocation8] sm:$0xff] %v155
    $region21: #{tpu_custom_call.1} parent=1 // pred_fallthru
      _
    // Predicated region
    $region22: #{tpu_custom_call.1} parent=1 // pred_check
      _
    $region23: #{tpu_custom_call.1} parent=1 // pred_check_branch
      %158 = sbr.rel (0) target = $region25
    $region24: #{tpu_custom_call.1} parent=1 // pred_region
      %s160 = ssub.s32 128, 128
      %161 = vsyncadd [#allocation7], %s160
      %s163 = sshll.u32 [#allocation8], 4
      %s164 = int_to_ptr.vmem [resolvable:$true] %s163
      %166 = dma.vmem_to_hbm [thread:$0]  %s164, 128, %s2, [#allocation7]
    $region25: #{tpu_custom_call.1} parent=1 // pred_fallthru
      _
    // Predicated region
    $region26: #{tpu_custom_call.1} parent=1 // pred_check
      _
    $region27: #{tpu_custom_call.1} parent=1 // pred_check_branch
      %168 = sbr.rel (0) target = $region29
    $region28: #{tpu_custom_call.1} parent=1 // pred_region
      %169 = dma.done [#allocation7], 128
    $region29: #{tpu_custom_call.1} parent=1 // pred_fallthru
      _
    %170 = vsyncpa [#allocation6], 1
    %171 = vsyncpa [#allocation7], 1

</llo_original>
